<compile_context>
chip_gen: v6e
topology: v6e:2x2x1
jax: 0.10.0
libtpu: 0.0.40
codegen_flags: <defaults>
</compile_context>

<pallas_src>
import math
import jax
import jax.numpy as jnp
from jax.experimental import pallas as pl
from jax.experimental.pallas import tpu as pltpu

# ---- problem sizes (consistent with the module defaults) --------------------
IN_F = 32          # in_feature
MID_F = 32         # middle_feature (defaults to in_feature)
OUT_F = 16         # out_feature
N_CENTERS = 2      # n_centers
SCALE = 64.0       # scale
EPS = 1e-12        # F.normalize eps

B_TILE = 128       # batch rows per grid step (lane-dense output tile width)

# ---- packed-parameter slab layout (sublane-aligned static offsets) ----------
PB_ROW = IN_F                              # bias row
W_OFF = ((IN_F + 1 + 7) // 8) * 8          # = 40, centers start (multiple of 8)
SLAB_ROWS = W_OFF + MID_F                  # = 72
SLAB_COLS = max(MID_F, N_CENTERS * OUT_F)  # = 32
# per-invocation VMEM: x tile 128x32 f32 (16 KiB) + slab 72x32 (9 KiB) + out
# 16x128 (8 KiB), double-buffered -> well under v7x's 32 MiB scoped default.


def distance_kernel(x_ref, p_ref, out_ref):
    # x_ref  : (B_TILE, IN_F) f32
    # p_ref  : (SLAB_ROWS, SLAB_COLS) f32 packed parameters
    # out_ref: (OUT_F, B_TILE) f32  (log-probs, transposed -> lane-dense store)
    x = x_ref[...]
    pw = p_ref[0:IN_F, 0:MID_F]                          # (IN, MID)
    pb = p_ref[PB_ROW:PB_ROW + 1, 0:MID_F]               # (1, MID)
    wn = p_ref[W_OFF:W_OFF + MID_F, 0:N_CENTERS * OUT_F] # (MID, NC*OUT), pre-normalized

    # ---- projection (Linear); dropout p=0 -> identity ----
    h = jnp.dot(x, pw, preferred_element_type=jnp.float32) + pb   # (B_TILE, MID)

    # ---- fold L2-normalization of h rows into a positive post-matmul row scale
    # F.normalize: v / max(||v||, eps)  ==  v * rsqrt(max(||v||^2, eps^2))
    h_ssq = jnp.sum(h * h, axis=-1, keepdims=True)                # (B_TILE, 1)
    h_inv = jax.lax.rsqrt(jnp.maximum(h_ssq, EPS * EPS))          # EUP rsqrt

    # ---- single MXU dot against all (pre-normalized) centers ----
    raw = jnp.dot(h, wn, preferred_element_type=jnp.float32)      # (B_TILE, NC*OUT)

    # ---- MaxPool1d over centers == max over 16-wide column blocks ----
    pooled = raw[:, :OUT_F]
    for c in range(1, N_CENTERS):                                 # static, tiny
        pooled = jnp.maximum(pooled, raw[:, c * OUT_F:(c + 1) * OUT_F])
    pooled = pooled * (SCALE * h_inv)   # positive scale commutes with the max

    # ---- log_softmax over the class dim (f32) ----
    m = jnp.max(pooled, axis=-1, keepdims=True)
    z = pooled - m
    lse = jnp.log(jnp.sum(jnp.exp(z), axis=-1, keepdims=True))

    # transpose (B_TILE, OUT_F) -> (OUT_F, B_TILE): batch lands on the 128-lane
    # axis, so the store is a full (unmasked) vst.
    out_ref[...] = jnp.transpose(z - lse).astype(out_ref.dtype)


def prepare_params(proj_w, proj_b, weight):
    """One-time (parameter-init) layout glue: torch layouts -> packed kernel slab.

    Rows 0..IN_F-1 : proj_w.T          (IN, MID)
    Row  IN_F      : proj_b            (1, MID)
    Rows ..W_OFF-1 : zero padding      (sublane alignment)
    Rows W_OFF..   : pre-L2-normalized centers, column c*OUT+o == original
                     center row o*NC+c, transposed to (MID, NC*OUT).
    """
    pw_t = proj_w.T.astype(jnp.float32)                         # (IN, MID)
    pb = proj_b.reshape(1, MID_F).astype(jnp.float32)
    w = (weight.reshape(OUT_F, N_CENTERS, MID_F)
               .transpose(1, 0, 2)
               .reshape(N_CENTERS * OUT_F, MID_F))              # regrouped centers
    nrm = jnp.sqrt(jnp.sum(w * w, axis=-1, keepdims=True))
    wn_t = (w / jnp.maximum(nrm, EPS)).T.astype(jnp.float32)    # (MID, NC*OUT)

    def pad_cols(a):
        return jnp.pad(a, ((0, 0), (0, SLAB_COLS - a.shape[1])))

    zpad = jnp.zeros((W_OFF - (IN_F + 1), SLAB_COLS), jnp.float32)
    slab = jnp.concatenate(
        [pad_cols(pw_t), pad_cols(pb), zpad, pad_cols(wn_t)], axis=0)
    assert slab.shape == (SLAB_ROWS, SLAB_COLS)
    return slab


def distance_layer(x, slab):
    """x:(B, IN_F) f32, packed slab -> (B, OUT_F) log-probabilities."""
    b = x.shape[0]
    b_pad = ((b + B_TILE - 1) // B_TILE) * B_TILE
    xp = x if b_pad == b else jnp.pad(x, ((0, b_pad - b), (0, 0)))

    out_t = pl.pallas_call(
        distance_kernel,
        out_shape=jax.ShapeDtypeStruct((OUT_F, b_pad), jnp.float32),
        grid=(b_pad // B_TILE,),
        in_specs=[
            pl.BlockSpec((B_TILE, IN_F), lambda i: (i, 0)),        # x batch tile
            pl.BlockSpec((SLAB_ROWS, SLAB_COLS), lambda i: (0, 0)) # params, resident
        ],
        out_specs=pl.BlockSpec((OUT_F, B_TILE), lambda i: (0, i)),
        compiler_params=pltpu.CompilerParams(
            dimension_semantics=("parallel",),   # shard batch tiles across TCs (v7x)
        ),
    )(xp, slab)
    # wrapper-side layout plumbing only (lane-dense store inside the kernel)
    return out_t[:, :b].T


# ---- pure-JAX reference mirroring the PyTorch forward ------------------------
def _l2_normalize_ref(v, axis=-1):
    nrm = jnp.sqrt(jnp.sum(v * v, axis=axis, keepdims=True))
    return v / jnp.maximum(nrm, EPS)


def distance_layer_ref(x, proj_w, proj_b, weight):
    h = x @ proj_w.T + proj_b
    hn = _l2_normalize_ref(h)
    wn = _l2_normalize_ref(weight)
    out = SCALE * (hn @ wn.T)                                    # (B, OUT*NC)
    out = jnp.max(out.reshape(x.shape[0], OUT_F, N_CENTERS), axis=-1)
    return jax.nn.log_softmax(out, axis=-1)


if __name__ == "__main__":
    key = jax.random.PRNGKey(0)
    k_x, k_pw, k_pb, k_w = jax.random.split(key, 4)

    B = 256   # two 128-row grid steps; small but exercises the batched/parallel path
    x = jax.random.normal(k_x, (B, IN_F), dtype=jnp.float32)

    # nn.Linear default init bounds, deterministic
    lin_bound = 1.0 / math.sqrt(IN_F)
    proj_w = jax.random.uniform(k_pw, (MID_F, IN_F), minval=-lin_bound,
                                maxval=lin_bound, dtype=jnp.float32)
    proj_b = jax.random.uniform(k_pb, (MID_F,), minval=-lin_bound,
                                maxval=lin_bound, dtype=jnp.float32)

    # xavier_uniform_ for the center weight (OUT*NC, MID)
    xav = math.sqrt(6.0 / (MID_F + OUT_F * N_CENTERS))
    weight = jax.random.uniform(k_w, (OUT_F * N_CENTERS, MID_F), minval=-xav,
                                maxval=xav, dtype=jnp.float32)

    # one-time parameter packing + center normalization (not on the per-call path)
    slab = jax.block_until_ready(prepare_params(proj_w, proj_b, weight))

    out = jax.block_until_ready(distance_layer(x, slab))
    ref = distance_layer_ref(x, proj_w, proj_b, weight)
    assert out.shape == (B, OUT_F)
    assert jnp.allclose(out, ref, atol=1e-4, rtol=1e-4), "mismatch vs reference"
    print("KERNEL_OK")
</pallas_src>

<mosaic_0001>
module attributes {stable_mosaic.version = 11 : i64} {
  func.func @distance_kernel(%arg0: i32, %arg1: memref<128x32xf32, #tpu.memory_space<vmem>>, %arg2: memref<72x32xf32, #tpu.memory_space<vmem>>, %arg3: memref<16x128xf32, #tpu.memory_space<vmem>>) attributes {dimension_semantics = [#tpu.dimension_semantics<parallel>], iteration_bounds = array<i64: 2>, scalar_prefetch = 0 : i64, scratch_operands = 0 : i64, tpu.core_type = #tpu.core_type<tc>, window_params = [{transform_indices = @transform_0, window_bounds = array<i64: 128, 32>}, {pipeline_mode = #tpu.pipeline_mode<synchronous>, transform_indices = @transform_1, window_bounds = array<i64: 72, 32>}, {transform_indices = @transform_2, window_bounds = array<i64: 16, 128>}]} {
    %c0 = arith.constant 0 : index
    %c0_0 = arith.constant 0 : index
    %0 = vector.load %arg1[%c0, %c0_0] : memref<128x32xf32, #tpu.memory_space<vmem>>, vector<128x32xf32>
    %c0_1 = arith.constant 0 : index
    %c0_2 = arith.constant 0 : index
    %1 = vector.load %arg2[%c0_1, %c0_2] : memref<72x32xf32, #tpu.memory_space<vmem>>, vector<32x32xf32>
    %c32 = arith.constant 32 : index
    %c0_3 = arith.constant 0 : index
    %2 = vector.load %arg2[%c32, %c0_3] : memref<72x32xf32, #tpu.memory_space<vmem>>, vector<1x32xf32>
    %c40 = arith.constant 40 : index
    %c0_4 = arith.constant 0 : index
    %3 = vector.load %arg2[%c40, %c0_4] : memref<72x32xf32, #tpu.memory_space<vmem>>, vector<32x32xf32>
    %cst = arith.constant dense<0.000000e+00> : vector<128x32xf32>
    %4 = tpu.matmul %0, %1, %cst {dimension_numbers = #tpu.dot_dimension_numbers<[1], [0], [0], [1], [0, 0, 1, 1], [], []>} : vector<128x32xf32>, vector<32x32xf32>, vector<128x32xf32> -> vector<128x32xf32>
    %5 = vector.broadcast %2 : vector<1x32xf32> to vector<128x32xf32>
    %6 = arith.addf %4, %5 : vector<128x32xf32>
    %7 = arith.mulf %6, %6 : vector<128x32xf32>
    %cst_5 = arith.constant dense<0.000000e+00> : vector<128xf32>
    %8 = vector.multi_reduction <add>, %7, %cst_5 [1] : vector<128x32xf32> to vector<128xf32>
    %9 = vector.shape_cast %8 : vector<128xf32> to vector<128x1xf32>
    %cst_6 = arith.constant 1.000000e-24 : f32
    %10 = vector.broadcast %cst_6 : f32 to vector<128x1xf32>
    %11 = arith.maximumf %9, %10 : vector<128x1xf32>
    %12 = math.rsqrt %11 : vector<128x1xf32>
    %cst_7 = arith.constant dense<0.000000e+00> : vector<128x32xf32>
    %13 = tpu.matmul %6, %3, %cst_7 {dimension_numbers = #tpu.dot_dimension_numbers<[1], [0], [0], [1], [0, 0, 1, 1], [], []>} : vector<128x32xf32>, vector<32x32xf32>, vector<128x32xf32> -> vector<128x32xf32>
    %14 = vector.extract_strided_slice %13 {offsets = [0, 0], sizes = [128, 16], strides = [1, 1]} : vector<128x32xf32> to vector<128x16xf32>
    %15 = vector.extract_strided_slice %13 {offsets = [0, 16], sizes = [128, 16], strides = [1, 1]} : vector<128x32xf32> to vector<128x16xf32>
    %16 = arith.maximumf %14, %15 : vector<128x16xf32>
    %cst_8 = arith.constant 6.400000e+01 : f32
    %17 = vector.broadcast %cst_8 : f32 to vector<128x1xf32>
    %18 = arith.mulf %17, %12 : vector<128x1xf32>
    %19 = vector.broadcast %18 : vector<128x1xf32> to vector<128x16xf32>
    %20 = arith.mulf %16, %19 : vector<128x16xf32>
    %cst_9 = arith.constant dense<0xFF800000> : vector<128xf32>
    %21 = vector.multi_reduction <maximumf>, %20, %cst_9 [1] : vector<128x16xf32> to vector<128xf32>
    %22 = vector.shape_cast %21 : vector<128xf32> to vector<128x1xf32>
    %23 = vector.broadcast %22 : vector<128x1xf32> to vector<128x16xf32>
    %24 = arith.subf %20, %23 : vector<128x16xf32>
    %25 = math.exp %24 : vector<128x16xf32>
    %cst_10 = arith.constant dense<0.000000e+00> : vector<128xf32>
    %26 = vector.multi_reduction <add>, %25, %cst_10 [1] : vector<128x16xf32> to vector<128xf32>
    %27 = vector.shape_cast %26 : vector<128xf32> to vector<128x1xf32>
    %28 = math.log %27 : vector<128x1xf32>
    %29 = vector.broadcast %28 : vector<128x1xf32> to vector<128x16xf32>
    %30 = arith.subf %24, %29 : vector<128x16xf32>
    %31 = tpu.transpose %30, [1, 0] : vector<128x16xf32> -> vector<16x128xf32>
    %c0_11 = arith.constant 0 : index
    %c0_12 = arith.constant 0 : index
    %32 = vector.load %arg3[%c0_11, %c0_12] : memref<16x128xf32, #tpu.memory_space<vmem>>, vector<16x128xf32>
    tpu.vector_store %arg3[%c0_11, %c0_12], %31 {strides = array<i32>} : memref<16x128xf32, #tpu.memory_space<vmem>>, vector<16x128xf32>,
    return
  }
  func.func @transform_0(%arg0: i32) -> (i32, i32) {
    %c0_i32 = arith.constant 0 : i32
    %c0_i32_0 = arith.constant 0 : i32
    return %arg0, %c0_i32 : i32, i32
  }
  func.func @transform_1(%arg0: i32) -> (i32, i32) {
    %c0_i32 = arith.constant 0 : i32
    %c0_i32_0 = arith.constant 0 : i32
    %c0_i32_1 = arith.constant 0 : i32
    return %c0_i32, %c0_i32_0 : i32, i32
  }
  func.func @transform_2(%arg0: i32) -> (i32, i32) {
    %c0_i32 = arith.constant 0 : i32
    %c0_i32_0 = arith.constant 0 : i32
    return %c0_i32, %arg0 : i32, i32
  }
}

</mosaic_0001>

<llo_original>
// kernel: tpu_custom_call.1
$region0: #{tpu_custom_call.1}
  #allocation0 [shape = 'u32[]', space=smem, size = 0x4, offset = 0x4, fixed_abs, tag = 'smem constant byte address 0x4 - core index']
  #allocation1 [shape = 'u32[144,128]{1,0:T(1,128)}', space=vmem, size = 0x12000, scoped, tag = 'internal scratch']
  %s0 = inlined_call_operand.vmem [shape: f32[256,32], index: 0, kind: input, shape index: {}]
  %s1 = inlined_call_operand.vmem [shape: f32[72,32], index: 1, kind: input, shape index: {}]
  %s2 = inlined_call_operand.hbm [shape: f32[16,256], index: 2, kind: output, shape index: {}]
  %s3 = sld [smem:[#allocation0]]
  $region41: #{tpu_custom_call.1} parent=0
    _
  %s5 = ssub.s32 1, %s3
  %s6 = scalar_select 0, %s5, %s3
  $region1: #{tpu_custom_call.1} parent=0
    #allocation2 [shape = 'u8[16384]{0}', space=vmem, size = 0x4000, scoped, tag = 'output window, operand 0']
    #allocation3 [shape = 's32[2]{0}', space=sflag, size = 0x8, scoped, tag = 'scoped memory for tpu_custom_call.1']
    %7 = vsyncpa [#allocation3], 0
    %s8 = scalar_lea.sflag [#allocation3], 1
    %9 = vsyncpa %s8, 0
    loop: start=0, step=1, limit=4
    $region2: #{tpu_custom_call.1} parent=1 // loop_pre_header
      _
    $region3: #{tpu_custom_call.1} parent=1 // loop_header
      %s11 = sphi 0, %s15
      %p12 = scmp.ge.s32.totalorder %s11, 4
      %s21 = sphi 0, %s23
      %s24 = sphi 0, %s21
      %s25 = sphi 0, %s24
      %s41 = sphi 0, %s25
      %s45 = sphi 0, %s45
      %s47 = sphi 0, %s45
      %s48 = sphi 0, %s47
      %s62 = sphi 0, %s48
      %s68 = sphi 0, %s70
      %s71 = sphi 0, %s68
      %s72 = sphi 0, %s71
      %s88 = sphi 0, %s72
    $region4: #{tpu_custom_call.1} parent=1 // loop_header_branch
      %14 = sbr.rel (%p12) target = $region8
    $region5: #{tpu_custom_call.1} parent=1 // loop_body
      %s16 = ssub.s32 %s11, 1
      %s17 = ssub.s32 %s11, 2
      %s18 = sadd.s32 %s11, 1
      %s19 = ssub.s32 %s11, %s18
      %p20 = scmp.eq.s32.totalorder %s19, 0
      %s22 = sadd.s32 %s21, 1
      %s23 = scalar_select %p20, %s21, %s22
      %p26 = pneg %p20
      %p27 = scmp.eq.s32.totalorder %s11, 1
      %p28 = por %p26, %p27
      %p29 = scmp.ne.s32.totalorder %s21, %s24
      %p30 = scmp.eq.s32.totalorder %s11, 0
      %p31 = por %p29, %p30
      %p32 = scmp.ne.s32.totalorder %s21, %s24
      %p33 = scmp.eq.s32.totalorder %s16, 1
      %p34 = por %p32, %p33
      %p35 = scmp.ne.s32.totalorder %s24, %s25
      %p36 = scmp.eq.s32.totalorder %s16, 0
      %p37 = por %p35, %p36
      %p38 = scmp.ne.s32.totalorder %s24, %s25
      %p39 = scmp.eq.s32.totalorder %s17, 1
      %p40 = por %p38, %p39
      %p42 = scmp.ne.s32.totalorder %s25, %s41
      %p43 = scmp.eq.s32.totalorder %s17, 0
      %p44 = por %p42, %p43
      %s46 = sadd.s32 %s45, 1
      %p49 = scmp.eq.s32.totalorder %s11, 1
      %p50 = scmp.ne.s32.totalorder %s45, %s47
      %p51 = scmp.eq.s32.totalorder %s11, 0
      %p52 = por %p50, %p51
      %p53 = scmp.ne.s32.totalorder %s45, %s47
      %p54 = scmp.eq.s32.totalorder %s16, 1
      %p55 = por %p53, %p54
      %p56 = scmp.ne.s32.totalorder %s47, %s48
      %p57 = scmp.eq.s32.totalorder %s16, 0
      %p58 = por %p56, %p57
      %p59 = scmp.ne.s32.totalorder %s47, %s48
      %p60 = scmp.eq.s32.totalorder %s17, 1
      %p61 = por %p59, %p60
      %p63 = scmp.ne.s32.totalorder %s48, %s62
      %p64 = scmp.eq.s32.totalorder %s17, 0
      %p65 = por %p63, %p64
      %s66 = ssub.s32 %s11, %s18
      %p67 = scmp.eq.s32.totalorder %s66, 0
      %s69 = sadd.s32 %s68, 1
      %s70 = scalar_select %p67, %s68, %s69
      %p73 = pneg %p67
      %p74 = scmp.eq.s32.totalorder %s11, 1
      %p75 = por %p73, %p74
      %p76 = scmp.ne.s32.totalorder %s68, %s71
      %p77 = scmp.eq.s32.totalorder %s11, 0
      %p78 = por %p76, %p77
      %p79 = scmp.ne.s32.totalorder %s68, %s71
      %p80 = scmp.eq.s32.totalorder %s16, 1
      %p81 = por %p79, %p80
      %p82 = scmp.ne.s32.totalorder %s71, %s72
      %p83 = scmp.eq.s32.totalorder %s16, 0
      %p84 = por %p82, %p83
      %p85 = scmp.ne.s32.totalorder %s71, %s72
      %p86 = scmp.eq.s32.totalorder %s17, 1
      %p87 = por %p85, %p86
      %p89 = scmp.ne.s32.totalorder %s72, %s88
      %p90 = scmp.eq.s32.totalorder %s17, 0
      %p91 = por %p89, %p90
      %p92 = scmp.le.s32.totalorder 1, %s11
      %p93 = scmp.lt.s32.totalorder %s11, 3
      %p94 = pnand %p92, %p93
      %p95 = pneg %p94
      // Predicated region
      $region9: #{tpu_custom_call.1} parent=5 // pred_check
        _
      $region10: #{tpu_custom_call.1} parent=5 // pred_check_branch
        %97 = sbr.rel (%p94) target = $region12
      $region11: #{tpu_custom_call.1} parent=5 // pred_region
        %s98 = ssub.s32 %s11, 1
        // Predicated region
        $region13: #{tpu_custom_call.1} parent=11 // pred_check
          %p99 = pneg %p58
        $region14: #{tpu_custom_call.1} parent=11 // pred_check_branch
          %101 = sbr.rel (%p99) target = $region16
        $region15: #{tpu_custom_call.1} parent=11 // pred_region
          _
        $region16: #{tpu_custom_call.1} parent=11 // pred_fallthru
          _
      $region12: #{tpu_custom_call.1} parent=5 // pred_fallthru
        _
      %p102 = scmp.lt.s32.totalorder %s11, 2
      // Predicated region
      $region17: #{tpu_custom_call.1} parent=5 // pred_check
        %p103 = pneg %p102
      $region18: #{tpu_custom_call.1} parent=5 // pred_check_branch
        %105 = sbr.rel (%p103) target = $region20
      $region19: #{tpu_custom_call.1} parent=5 // pred_region
        // Predicated region
        $region21: #{tpu_custom_call.1} parent=19 // pred_check
          %p106 = pneg %p31
        $region22: #{tpu_custom_call.1} parent=19 // pred_check_branch
          %108 = sbr.rel (%p106) target = $region24
        $region23: #{tpu_custom_call.1} parent=19 // pred_region
          %s109 = smul.u32 16, %s11
          %p110 = scmp.lt.s32.totalorder %s109, 31
          %s111 = scalar_select %p110, %s109, 31
          %s112 = smul.addr %s111, 8
          %s113 = scalar_lea.vmem %s0, %s112
          %s114 = smul.u32 16, %s11
        $region24: #{tpu_custom_call.1} parent=19 // pred_fallthru
          _
      $region20: #{tpu_custom_call.1} parent=5 // pred_fallthru
        _
      %p115 = scmp.le.s32.totalorder 1, %s11
      %p116 = scmp.lt.s32.totalorder %s11, 3
      %p117 = pnand %p115, %p116
      %p118 = pneg %p117
      // Predicated region
      $region25: #{tpu_custom_call.1} parent=5 // pred_check
        _
      $region26: #{tpu_custom_call.1} parent=5 // pred_check_branch
        %120 = sbr.rel (%p117) target = $region28
      $region27: #{tpu_custom_call.1} parent=5 // pred_region
        %s121 = ssub.s32 %s11, 1
        %s122 = smul.u32 16, %s16
        %p123 = scmp.lt.s32.totalorder %s122, 31
        %s124 = scalar_select %p123, %s122, 31
        %s125 = smul.addr %s124, 8
        %s126 = scalar_lea.vmem %s0, %s125
        %p127 = pneg %p37
        %p128 = pneg %p34
        %p129 = pneg %p58
        %p130 = pneg %p55
        %p131 = pneg %p84
        %p132 = pneg %p81
        %s133 = sand.u32 %s71, 1
        %s134 = scalar_lea.sflag [#allocation3], %s133
        %s135 = sand.u32 %s71, 1
        %s136 = smul.addr %s135, 16
        %s137 = scalar_lea.vmem [#allocation2], %s136
        %s138 = smul.u32 16, %s16
        %p139 = scmp.lt.s32.totalorder %s138, 31
        %s140 = scalar_select %p139, %s138, 31
        %s141 = smul.addr %s140, 8
        %s142 = scalar_lea.vmem %s0, %s141
        %s143 = smul.u32 16, %s16
        %v144 = vld [vmem:[%s142] sm:$0xff]
        %v145 = vld [vmem:[%s142 + $0x8] sm:$0xff]
        %v146 = vld [vmem:[%s142 + $0x10] sm:$0xff]
        %v147 = vld [vmem:[%s142 + $0x18] sm:$0xff]
        %v148 = vld [vmem:[%s142 + $0x20] sm:$0xff]
        %v149 = vld [vmem:[%s142 + $0x28] sm:$0xff]
        %v150 = vld [vmem:[%s142 + $0x30] sm:$0xff]
        %v151 = vld [vmem:[%s142 + $0x38] sm:$0xff]
        %v152 = vld [vmem:[%s142 + $0x40] sm:$0xff]
        %v153 = vld [vmem:[%s142 + $0x48] sm:$0xff]
        %v154 = vld [vmem:[%s142 + $0x50] sm:$0xff]
        %v155 = vld [vmem:[%s142 + $0x58] sm:$0xff]
        %v156 = vld [vmem:[%s142 + $0x60] sm:$0xff]
        %v157 = vld [vmem:[%s142 + $0x68] sm:$0xff]
        %v158 = vld [vmem:[%s142 + $0x70] sm:$0xff]
        %v159 = vld [vmem:[%s142 + $0x78] sm:$0xff]
        %v160 = vld [vmem:[%s1] sm:$0xff]
        %v161 = vld [vmem:[%s1 + $0x8] sm:$0xff]
        %v162 = vld [vmem:[%s1 + $0x10] sm:$0xff]
        %v163 = vld [vmem:[%s1 + $0x18] sm:$0xff]
        %v164 = vld [vmem:[%s1 + $0x20] sm:$0x1]
        %v165 = vld [vmem:[%s1 + $0x28] sm:$0xff]
        %v166 = vld [vmem:[%s1 + $0x30] sm:$0xff]
        %v167 = vld [vmem:[%s1 + $0x38] sm:$0xff]
        %v168 = vld [vmem:[%s1 + $0x40] sm:$0xff]
        %v169 = vlaneseq
        %v170 = vshrl.u32 %v169, 7
        %v171 = vsub.s32 0, %v170
        %v172 = vrot.slane %v164, %v171
        %vm173 = vcmask 261120
        %v175 = vsel %vm173, %v144, 0
        %v178 = vsel %vm173, %v145, 0
        %v181 = vsel %vm173, %v146, 0
        %v184 = vsel %vm173, %v147, 0
        %v187 = vsel %vm173, %v148, 0
        %v190 = vsel %vm173, %v149, 0
        %v193 = vsel %vm173, %v150, 0
        %v196 = vsel %vm173, %v151, 0
        %v199 = vsel %vm173, %v152, 0
        %v202 = vsel %vm173, %v153, 0
        %v205 = vsel %vm173, %v154, 0
        %v208 = vsel %vm173, %v155, 0
        %v211 = vsel %vm173, %v156, 0
        %v214 = vsel %vm173, %v157, 0
        %v217 = vsel %vm173, %v158, 0
        %v220 = vsel %vm173, %v159, 0
        %222 = vmatprep.subr.mxu0 0.0
        %223 = vmatpush1.msra.mxu0 0.0
        %224 = vmatprep.subr.mxu0 0.0
        %225 = vmatpush1.msra.mxu0 0.0
        %226 = vmatprep.subr.mxu0 0.0
        %227 = vmatpush1.msra.mxu0 0.0
        %228 = vmatprep.subr.mxu0 0.0
        %229 = vmatpush1.msra.mxu0 0.0
        %230 = vmatprep.subr.mxu0 0.0
        %231 = vmatpush1.msra.mxu0 0.0
        %232 = vmatprep.subr.mxu0 0.0
        %233 = vmatpush1.msra.mxu0 0.0
        %234 = vmatprep.subr.mxu0 0.0
        %235 = vmatpush1.msra.mxu0 0.0
        %236 = vmatprep.subr.mxu0 0.0
        %237 = vmatpush1.msra.mxu0 0.0
        %238 = vmatprep.subr.mxu0 0.0
        %239 = vmatpush1.msra.mxu0 0.0
        %240 = vmatprep.subr.mxu0 0.0
        %241 = vmatpush1.msra.mxu0 0.0
        %242 = vmatprep.subr.mxu0 0.0
        %243 = vmatpush1.msra.mxu0 0.0
        %244 = vmatprep.subr.mxu0 0.0
        %245 = vmatpush1.msra.mxu0 0.0
        %246 = vmatprep.subr.mxu0 0.0
        %247 = vmatpush1.msra.mxu0 %v163
        %248 = vmatprep.subr.mxu0 0.0
        %249 = vmatpush1.msra.mxu0 %v162
        %250 = vmatprep.subr.mxu0 0.0
        %251 = vmatpush1.msra.mxu0 %v161
        %252 = vmatprep.subr.mxu0 0.0
        %253 = vmatpush1.msra.mxu0 %v160
        %254 = vmatprep.subr.mxu0 0.0
        %255 = vmatpush2.msra.mxu0 0.0
        %256 = vmatprep.subr.mxu0 0.0
        %257 = vmatpush2.msra.mxu0 0.0
        %258 = vmatprep.subr.mxu0 0.0
        %259 = vmatpush2.msra.mxu0 0.0
        %260 = vmatprep.subr.mxu0 0.0
        %261 = vmatpush2.msra.mxu0 0.0
        %262 = vmatprep.subr.mxu0 0.0
        %263 = vmatpush2.msra.mxu0 0.0
        %264 = vmatprep.subr.mxu0 0.0
        %265 = vmatpush2.msra.mxu0 0.0
        %266 = vmatprep.subr.mxu0 0.0
        %267 = vmatpush2.msra.mxu0 0.0
        %268 = vmatprep.subr.mxu0 0.0
        %269 = vmatpush2.msra.mxu0 0.0
        %270 = vmatprep.subr.mxu0 0.0
        %271 = vmatpush2.msra.mxu0 0.0
        %272 = vmatprep.subr.mxu0 0.0
        %273 = vmatpush2.msra.mxu0 0.0
        %274 = vmatprep.subr.mxu0 0.0
        %275 = vmatpush2.msra.mxu0 0.0
        %276 = vmatprep.subr.mxu0 0.0
        %277 = vmatpush2.msra.mxu0 0.0
        %278 = vmatprep.subr.mxu0 0.0
        %279 = vmatpush2.msra.mxu0 0.0
        %280 = vmatprep.subr.mxu0 0.0
        %281 = vmatpush2.msra.mxu0 0.0
        %282 = vmatprep.subr.mxu0 0.0
        %283 = vmatpush2.msra.mxu0 0.0
        %284 = vmatprep.subr.mxu0 0.0
        %285 = vmatpush2.msra.mxu0 0.0
        %286 = vmatprep.mubr.f32.mxu0 0.0
        %287 = vmatmul.mubr.f32.gmra.mxu0 %v175
        %v288 = vpop.f32.mrf.mxu0
        %v289 = vadd.f32 %v172, %v288
        %v290 = vpop.f32.mrf.mxu0
        %291 = vmatprep.mubr.f32.mxu0 0.0
        %292 = vmatmul.mubr.f32.gmra.mxu0 %v178
        %v293 = vpop.f32.mrf.mxu0
        %v294 = vadd.f32 %v172, %v293
        %v295 = vpop.f32.mrf.mxu0
        %296 = vmatprep.mubr.f32.mxu0 0.0
        %297 = vmatmul.mubr.f32.gmra.mxu0 %v181
        %v298 = vpop.f32.mrf.mxu0
        %v299 = vadd.f32 %v172, %v298
        %v300 = vpop.f32.mrf.mxu0
        %301 = vmatprep.mubr.f32.mxu0 0.0
        %302 = vmatmul.mubr.f32.gmra.mxu0 %v184
        %v303 = vpop.f32.mrf.mxu0
        %v304 = vadd.f32 %v172, %v303
        %v305 = vpop.f32.mrf.mxu0
        %306 = vmatprep.mubr.f32.mxu0 0.0
        %307 = vmatmul.mubr.f32.gmra.mxu0 %v187
        %v308 = vpop.f32.mrf.mxu0
        %v309 = vadd.f32 %v172, %v308
        %v310 = vpop.f32.mrf.mxu0
        %311 = vmatprep.mubr.f32.mxu0 0.0
        %312 = vmatmul.mubr.f32.gmra.mxu0 %v190
        %v313 = vpop.f32.mrf.mxu0
        %v314 = vadd.f32 %v172, %v313
        %v315 = vpop.f32.mrf.mxu0
        %316 = vmatprep.mubr.f32.mxu0 0.0
        %317 = vmatmul.mubr.f32.gmra.mxu0 %v193
        %v318 = vpop.f32.mrf.mxu0
        %v319 = vadd.f32 %v172, %v318
        %v320 = vpop.f32.mrf.mxu0
        %321 = vmatprep.mubr.f32.mxu0 0.0
        %322 = vmatmul.mubr.f32.gmra.mxu0 %v196
        %v323 = vpop.f32.mrf.mxu0
        %v324 = vadd.f32 %v172, %v323
        %v325 = vpop.f32.mrf.mxu0
        %326 = vmatprep.mubr.f32.mxu0 0.0
        %327 = vmatmul.mubr.f32.gmra.mxu0 %v199
        %v328 = vpop.f32.mrf.mxu0
        %v329 = vadd.f32 %v172, %v328
        %v330 = vpop.f32.mrf.mxu0
        %331 = vmatprep.mubr.f32.mxu0 0.0
        %332 = vmatmul.mubr.f32.gmra.mxu0 %v202
        %v333 = vpop.f32.mrf.mxu0
        %v334 = vadd.f32 %v172, %v333
        %v335 = vpop.f32.mrf.mxu0
        %336 = vmatprep.mubr.f32.mxu0 0.0
        %337 = vmatmul.mubr.f32.gmra.mxu0 %v205
        %v338 = vpop.f32.mrf.mxu0
        %v339 = vadd.f32 %v172, %v338
        %v340 = vpop.f32.mrf.mxu0
        %341 = vmatprep.mubr.f32.mxu0 0.0
        %342 = vmatmul.mubr.f32.gmra.mxu0 %v208
        %v343 = vpop.f32.mrf.mxu0
        %v344 = vadd.f32 %v172, %v343
        %v345 = vpop.f32.mrf.mxu0
        %346 = vmatprep.mubr.f32.mxu0 0.0
        %347 = vmatmul.mubr.f32.gmra.mxu0 %v211
        %v348 = vpop.f32.mrf.mxu0
        %v349 = vadd.f32 %v172, %v348
        %v350 = vpop.f32.mrf.mxu0
        %351 = vmatprep.mubr.f32.mxu0 0.0
        %352 = vmatmul.mubr.f32.gmra.mxu0 %v214
        %v353 = vpop.f32.mrf.mxu0
        %v354 = vadd.f32 %v172, %v353
        %v355 = vpop.f32.mrf.mxu0
        %356 = vmatprep.mubr.f32.mxu0 0.0
        %357 = vmatmul.mubr.f32.gmra.mxu0 %v217
        %v358 = vpop.f32.mrf.mxu0
        %v359 = vadd.f32 %v172, %v358
        %v360 = vpop.f32.mrf.mxu0
        %361 = vmatprep.mubr.f32.mxu0 0.0
        %362 = vmatmul.mubr.f32.gmra.mxu0 %v220
        %v363 = vpop.f32.mrf.mxu0
        %v364 = vadd.f32 %v172, %v363
        %v365 = vpop.f32.mrf.mxu0
        %366 = vdwg.mxu0
        %v367 = vmul.f32 %v289, %v289
        %v368 = vmul.f32 %v294, %v294
        %v369 = vmul.f32 %v299, %v299
        %v370 = vmul.f32 %v304, %v304
        %v371 = vmul.f32 %v309, %v309
        %v372 = vmul.f32 %v314, %v314
        %v373 = vmul.f32 %v319, %v319
        %v374 = vmul.f32 %v324, %v324
        %v375 = vmul.f32 %v329, %v329
        %v376 = vmul.f32 %v334, %v334
        %v377 = vmul.f32 %v339, %v339
        %v378 = vmul.f32 %v344, %v344
        %v379 = vmul.f32 %v349, %v349
        %v380 = vmul.f32 %v354, %v354
        %v381 = vmul.f32 %v359, %v359
        %v382 = vmul.f32 %v364, %v364
        %v383 = vsel %vm173, %v367, 0.0
        %384 = vadd.xlane.f32.xlu0 %v383
        %v385 = vpop.xlane.xlu0 %384
        %v386 = vsel %vm173, %v368, 0.0
        %387 = vadd.xlane.f32.xlu0 %v386
        %v388 = vpop.xlane.xlu0 %387
        %v389 = vsel %vm173, %v369, 0.0
        %390 = vadd.xlane.f32.xlu0 %v389
        %v391 = vpop.xlane.xlu0 %390
        %v392 = vsel %vm173, %v370, 0.0
        %393 = vadd.xlane.f32.xlu0 %v392
        %v394 = vpop.xlane.xlu0 %393
        %v395 = vsel %vm173, %v371, 0.0
        %396 = vadd.xlane.f32.xlu0 %v395
        %v397 = vpop.xlane.xlu0 %396
        %v398 = vsel %vm173, %v372, 0.0
        %399 = vadd.xlane.f32.xlu0 %v398
        %v400 = vpop.xlane.xlu0 %399
        %v401 = vsel %vm173, %v373, 0.0
        %402 = vadd.xlane.f32.xlu0 %v401
        %v403 = vpop.xlane.xlu0 %402
        %v404 = vsel %vm173, %v374, 0.0
        %405 = vadd.xlane.f32.xlu0 %v404
        %v406 = vpop.xlane.xlu0 %405
        %v407 = vsel %vm173, %v375, 0.0
        %408 = vadd.xlane.f32.xlu0 %v407
        %v409 = vpop.xlane.xlu0 %408
        %v410 = vsel %vm173, %v376, 0.0
        %411 = vadd.xlane.f32.xlu0 %v410
        %v412 = vpop.xlane.xlu0 %411
        %v413 = vsel %vm173, %v377, 0.0
        %414 = vadd.xlane.f32.xlu0 %v413
        %v415 = vpop.xlane.xlu0 %414
        %v416 = vsel %vm173, %v378, 0.0
        %417 = vadd.xlane.f32.xlu0 %v416
        %v418 = vpop.xlane.xlu0 %417
        %v419 = vsel %vm173, %v379, 0.0
        %420 = vadd.xlane.f32.xlu0 %v419
        %v421 = vpop.xlane.xlu0 %420
        %v422 = vsel %vm173, %v380, 0.0
        %423 = vadd.xlane.f32.xlu0 %v422
        %v424 = vpop.xlane.xlu0 %423
        %v425 = vsel %vm173, %v381, 0.0
        %426 = vadd.xlane.f32.xlu0 %v425
        %v427 = vpop.xlane.xlu0 %426
        %v428 = vsel %vm173, %v382, 0.0
        %429 = vadd.xlane.f32.xlu0 %v428
        %v430 = vpop.xlane.xlu0 %429
        %v431 = vmax.f32 %v385, 1e-24
        %v432 = vmax.f32 %v388, 1e-24
        %v433 = vmax.f32 %v391, 1e-24
        %v434 = vmax.f32 %v394, 1e-24
        %v435 = vmax.f32 %v397, 1e-24
        %v436 = vmax.f32 %v400, 1e-24
        %v437 = vmax.f32 %v403, 1e-24
        %v438 = vmax.f32 %v406, 1e-24
        %v439 = vmax.f32 %v409, 1e-24
        %v440 = vmax.f32 %v412, 1e-24
        %v441 = vmax.f32 %v415, 1e-24
        %v442 = vmax.f32 %v418, 1e-24
        %v443 = vmax.f32 %v421, 1e-24
        %v444 = vmax.f32 %v424, 1e-24
        %v445 = vmax.f32 %v427, 1e-24
        %v446 = vmax.f32 %v430, 1e-24
        %v447 = vrsqrt.pop %v431
        %v448 = vrsqrt.pop %v432
        %v449 = vrsqrt.pop %v433
        %v450 = vrsqrt.pop %v434
        %v451 = vrsqrt.pop %v435
        %v452 = vrsqrt.pop %v436
        %v453 = vrsqrt.pop %v437
        %v454 = vrsqrt.pop %v438
        %v455 = vrsqrt.pop %v439
        %v456 = vrsqrt.pop %v440
        %v457 = vrsqrt.pop %v441
        %v458 = vrsqrt.pop %v442
        %v459 = vrsqrt.pop %v443
        %v460 = vrsqrt.pop %v444
        %v461 = vrsqrt.pop %v445
        %v462 = vrsqrt.pop %v446
        %v464 = vsel %vm173, %v289, 0
        %v467 = vsel %vm173, %v294, 0
        %v470 = vsel %vm173, %v299, 0
        %v473 = vsel %vm173, %v304, 0
        %v476 = vsel %vm173, %v309, 0
        %v479 = vsel %vm173, %v314, 0
        %v482 = vsel %vm173, %v319, 0
        %v485 = vsel %vm173, %v324, 0
        %v488 = vsel %vm173, %v329, 0
        %v491 = vsel %vm173, %v334, 0
        %v494 = vsel %vm173, %v339, 0
        %v497 = vsel %vm173, %v344, 0
        %v500 = vsel %vm173, %v349, 0
        %v503 = vsel %vm173, %v354, 0
        %v506 = vsel %vm173, %v359, 0
        %v509 = vsel %vm173, %v364, 0
        %511 = vmatprep.subr.mxu0 0.0
        %512 = vmatpush1.msra.mxu0 0.0
        %513 = vmatprep.subr.mxu0 0.0
        %514 = vmatpush1.msra.mxu0 0.0
        %515 = vmatprep.subr.mxu0 0.0
        %516 = vmatpush1.msra.mxu0 0.0
        %517 = vmatprep.subr.mxu0 0.0
        %518 = vmatpush1.msra.mxu0 0.0
        %519 = vmatprep.subr.mxu0 0.0
        %520 = vmatpush1.msra.mxu0 0.0
        %521 = vmatprep.subr.mxu0 0.0
        %522 = vmatpush1.msra.mxu0 0.0
        %523 = vmatprep.subr.mxu0 0.0
        %524 = vmatpush1.msra.mxu0 0.0
        %525 = vmatprep.subr.mxu0 0.0
        %526 = vmatpush1.msra.mxu0 0.0
        %527 = vmatprep.subr.mxu0 0.0
        %528 = vmatpush1.msra.mxu0 0.0
        %529 = vmatprep.subr.mxu0 0.0
        %530 = vmatpush1.msra.mxu0 0.0
        %531 = vmatprep.subr.mxu0 0.0
        %532 = vmatpush1.msra.mxu0 0.0
        %533 = vmatprep.subr.mxu0 0.0
        %534 = vmatpush1.msra.mxu0 0.0
        %535 = vmatprep.subr.mxu0 0.0
        %536 = vmatpush1.msra.mxu0 %v168
        %537 = vmatprep.subr.mxu0 0.0
        %538 = vmatpush1.msra.mxu0 %v167
        %539 = vmatprep.subr.mxu0 0.0
        %540 = vmatpush1.msra.mxu0 %v166
        %541 = vmatprep.subr.mxu0 0.0
        %542 = vmatpush1.msra.mxu0 %v165
        %543 = vmatprep.subr.mxu0 0.0
        %544 = vmatpush2.msra.mxu0 0.0
        %545 = vmatprep.subr.mxu0 0.0
        %546 = vmatpush2.msra.mxu0 0.0
        %547 = vmatprep.subr.mxu0 0.0
        %548 = vmatpush2.msra.mxu0 0.0
        %549 = vmatprep.subr.mxu0 0.0
        %550 = vmatpush2.msra.mxu0 0.0
        %551 = vmatprep.subr.mxu0 0.0
        %552 = vmatpush2.msra.mxu0 0.0
        %553 = vmatprep.subr.mxu0 0.0
        %554 = vmatpush2.msra.mxu0 0.0
        %555 = vmatprep.subr.mxu0 0.0
        %556 = vmatpush2.msra.mxu0 0.0
        %557 = vmatprep.subr.mxu0 0.0
        %558 = vmatpush2.msra.mxu0 0.0
        %559 = vmatprep.subr.mxu0 0.0
        %560 = vmatpush2.msra.mxu0 0.0
        %561 = vmatprep.subr.mxu0 0.0
        %562 = vmatpush2.msra.mxu0 0.0
        %563 = vmatprep.subr.mxu0 0.0
        %564 = vmatpush2.msra.mxu0 0.0
        %565 = vmatprep.subr.mxu0 0.0
        %566 = vmatpush2.msra.mxu0 0.0
        %567 = vmatprep.subr.mxu0 0.0
        %568 = vmatpush2.msra.mxu0 0.0
        %569 = vmatprep.subr.mxu0 0.0
        %570 = vmatpush2.msra.mxu0 0.0
        %571 = vmatprep.subr.mxu0 0.0
        %572 = vmatpush2.msra.mxu0 0.0
        %573 = vmatprep.subr.mxu0 0.0
        %574 = vmatpush2.msra.mxu0 0.0
        %575 = vmatprep.mubr.f32.mxu0 0.0
        %576 = vmatmul.mubr.f32.gmra.mxu0 %v464
        %v577 = vpop.f32.mrf.mxu0
        %v578 = vadd.f32 0.0, %v577
        %v579 = vpop.f32.mrf.mxu0
        %580 = vmatprep.mubr.f32.mxu0 0.0
        %581 = vmatmul.mubr.f32.gmra.mxu0 %v467
        %v582 = vpop.f32.mrf.mxu0
        %v583 = vadd.f32 0.0, %v582
        %v584 = vpop.f32.mrf.mxu0
        %585 = vmatprep.mubr.f32.mxu0 0.0
        %586 = vmatmul.mubr.f32.gmra.mxu0 %v470
        %v587 = vpop.f32.mrf.mxu0
        %v588 = vadd.f32 0.0, %v587
        %v589 = vpop.f32.mrf.mxu0
        %590 = vmatprep.mubr.f32.mxu0 0.0
        %591 = vmatmul.mubr.f32.gmra.mxu0 %v473
        %v592 = vpop.f32.mrf.mxu0
        %v593 = vadd.f32 0.0, %v592
        %v594 = vpop.f32.mrf.mxu0
        %595 = vmatprep.mubr.f32.mxu0 0.0
        %596 = vmatmul.mubr.f32.gmra.mxu0 %v476
        %v597 = vpop.f32.mrf.mxu0
        %v598 = vadd.f32 0.0, %v597
        %v599 = vpop.f32.mrf.mxu0
        %600 = vmatprep.mubr.f32.mxu0 0.0
        %601 = vmatmul.mubr.f32.gmra.mxu0 %v479
        %v602 = vpop.f32.mrf.mxu0
        %v603 = vadd.f32 0.0, %v602
        %v604 = vpop.f32.mrf.mxu0
        %605 = vmatprep.mubr.f32.mxu0 0.0
        %606 = vmatmul.mubr.f32.gmra.mxu0 %v482
        %v607 = vpop.f32.mrf.mxu0
        %v608 = vadd.f32 0.0, %v607
        %v609 = vpop.f32.mrf.mxu0
        %610 = vmatprep.mubr.f32.mxu0 0.0
        %611 = vmatmul.mubr.f32.gmra.mxu0 %v485
        %v612 = vpop.f32.mrf.mxu0
        %v613 = vadd.f32 0.0, %v612
        %v614 = vpop.f32.mrf.mxu0
        %615 = vmatprep.mubr.f32.mxu0 0.0
        %616 = vmatmul.mubr.f32.gmra.mxu0 %v488
        %v617 = vpop.f32.mrf.mxu0
        %v618 = vadd.f32 0.0, %v617
        %v619 = vpop.f32.mrf.mxu0
        %620 = vmatprep.mubr.f32.mxu0 0.0
        %621 = vmatmul.mubr.f32.gmra.mxu0 %v491
        %v622 = vpop.f32.mrf.mxu0
        %v623 = vadd.f32 0.0, %v622
        %v624 = vpop.f32.mrf.mxu0
        %625 = vmatprep.mubr.f32.mxu0 0.0
        %626 = vmatmul.mubr.f32.gmra.mxu0 %v494
        %v627 = vpop.f32.mrf.mxu0
        %v628 = vadd.f32 0.0, %v627
        %v629 = vpop.f32.mrf.mxu0
        %630 = vmatprep.mubr.f32.mxu0 0.0
        %631 = vmatmul.mubr.f32.gmra.mxu0 %v497
        %v632 = vpop.f32.mrf.mxu0
        %v633 = vadd.f32 0.0, %v632
        %v634 = vpop.f32.mrf.mxu0
        %635 = vmatprep.mubr.f32.mxu0 0.0
        %636 = vmatmul.mubr.f32.gmra.mxu0 %v500
        %v637 = vpop.f32.mrf.mxu0
        %v638 = vadd.f32 0.0, %v637
        %v639 = vpop.f32.mrf.mxu0
        %640 = vmatprep.mubr.f32.mxu0 0.0
        %641 = vmatmul.mubr.f32.gmra.mxu0 %v503
        %v642 = vpop.f32.mrf.mxu0
        %v643 = vadd.f32 0.0, %v642
        %v644 = vpop.f32.mrf.mxu0
        %645 = vmatprep.mubr.f32.mxu0 0.0
        %646 = vmatmul.mubr.f32.gmra.mxu0 %v506
        %v647 = vpop.f32.mrf.mxu0
        %v648 = vadd.f32 0.0, %v647
        %v649 = vpop.f32.mrf.mxu0
        %650 = vmatprep.mubr.f32.mxu0 0.0
        %651 = vmatmul.mubr.f32.gmra.mxu0 %v509
        %v652 = vpop.f32.mrf.mxu0
        %v653 = vadd.f32 0.0, %v652
        %v654 = vpop.f32.mrf.mxu0
        %655 = vdwg.mxu0
        %672 = vrot.lane.b32.xlu0 %v578, 112
        %v673 = vpop.permute.xlu0 %672
        %674 = vrot.lane.b32.xlu0 %v583, 112
        %v675 = vpop.permute.xlu0 %674
        %676 = vrot.lane.b32.xlu0 %v588, 112
        %v677 = vpop.permute.xlu0 %676
        %678 = vrot.lane.b32.xlu0 %v593, 112
        %v679 = vpop.permute.xlu0 %678
        %680 = vrot.lane.b32.xlu0 %v598, 112
        %v681 = vpop.permute.xlu0 %680
        %682 = vrot.lane.b32.xlu0 %v603, 112
        %v683 = vpop.permute.xlu0 %682
        %684 = vrot.lane.b32.xlu0 %v608, 112
        %v685 = vpop.permute.xlu0 %684
        %686 = vrot.lane.b32.xlu0 %v613, 112
        %v687 = vpop.permute.xlu0 %686
        %688 = vrot.lane.b32.xlu0 %v618, 112
        %v689 = vpop.permute.xlu0 %688
        %690 = vrot.lane.b32.xlu0 %v623, 112
        %v691 = vpop.permute.xlu0 %690
        %692 = vrot.lane.b32.xlu0 %v628, 112
        %v693 = vpop.permute.xlu0 %692
        %694 = vrot.lane.b32.xlu0 %v633, 112
        %v695 = vpop.permute.xlu0 %694
        %696 = vrot.lane.b32.xlu0 %v638, 112
        %v697 = vpop.permute.xlu0 %696
        %698 = vrot.lane.b32.xlu0 %v643, 112
        %v699 = vpop.permute.xlu0 %698
        %700 = vrot.lane.b32.xlu0 %v648, 112
        %v701 = vpop.permute.xlu0 %700
        %702 = vrot.lane.b32.xlu0 %v653, 112
        %v703 = vpop.permute.xlu0 %702
        %v720 = vmax.f32 %v578, %v673
        %v721 = vmax.f32 %v583, %v675
        %v722 = vmax.f32 %v588, %v677
        %v723 = vmax.f32 %v593, %v679
        %v724 = vmax.f32 %v598, %v681
        %v725 = vmax.f32 %v603, %v683
        %v726 = vmax.f32 %v608, %v685
        %v727 = vmax.f32 %v613, %v687
        %v728 = vmax.f32 %v618, %v689
        %v729 = vmax.f32 %v623, %v691
        %v730 = vmax.f32 %v628, %v693
        %v731 = vmax.f32 %v633, %v695
        %v732 = vmax.f32 %v638, %v697
        %v733 = vmax.f32 %v643, %v699
        %v734 = vmax.f32 %v648, %v701
        %v735 = vmax.f32 %v653, %v703
        %v736 = vmul.f32 %v447, 64.0
        %v737 = vmul.f32 %v448, 64.0
        %v738 = vmul.f32 %v449, 64.0
        %v739 = vmul.f32 %v450, 64.0
        %v740 = vmul.f32 %v451, 64.0
        %v741 = vmul.f32 %v452, 64.0
        %v742 = vmul.f32 %v453, 64.0
        %v743 = vmul.f32 %v454, 64.0
        %v744 = vmul.f32 %v455, 64.0
        %v745 = vmul.f32 %v456, 64.0
        %v746 = vmul.f32 %v457, 64.0
        %v747 = vmul.f32 %v458, 64.0
        %v748 = vmul.f32 %v459, 64.0
        %v749 = vmul.f32 %v460, 64.0
        %v750 = vmul.f32 %v461, 64.0
        %v751 = vmul.f32 %v462, 64.0
        %v752 = vmul.f32 %v720, %v736
        %v753 = vmul.f32 %v721, %v737
        %v754 = vmul.f32 %v722, %v738
        %v755 = vmul.f32 %v723, %v739
        %v756 = vmul.f32 %v724, %v740
        %v757 = vmul.f32 %v725, %v741
        %v758 = vmul.f32 %v726, %v742
        %v759 = vmul.f32 %v727, %v743
        %v760 = vmul.f32 %v728, %v744
        %v761 = vmul.f32 %v729, %v745
        %v762 = vmul.f32 %v730, %v746
        %v763 = vmul.f32 %v731, %v747
        %v764 = vmul.f32 %v732, %v748
        %v765 = vmul.f32 %v733, %v749
        %v766 = vmul.f32 %v734, %v750
        %v767 = vmul.f32 %v735, %v751
        %vm768 = vcmask 130048
        %v769 = vsel %vm768, %v752, -inf
        %770 = vmax.xlane.f32.xlu0 %v769
        %v771 = vpop.xlane.xlu0 %770
        %v772 = vsel %vm768, %v753, -inf
        %773 = vmax.xlane.f32.xlu0 %v772
        %v774 = vpop.xlane.xlu0 %773
        %v775 = vsel %vm768, %v754, -inf
        %776 = vmax.xlane.f32.xlu0 %v775
        %v777 = vpop.xlane.xlu0 %776
        %v778 = vsel %vm768, %v755, -inf
        %779 = vmax.xlane.f32.xlu0 %v778
        %v780 = vpop.xlane.xlu0 %779
        %v781 = vsel %vm768, %v756, -inf
        %782 = vmax.xlane.f32.xlu0 %v781
        %v783 = vpop.xlane.xlu0 %782
        %v784 = vsel %vm768, %v757, -inf
        %785 = vmax.xlane.f32.xlu0 %v784
        %v786 = vpop.xlane.xlu0 %785
        %v787 = vsel %vm768, %v758, -inf
        %788 = vmax.xlane.f32.xlu0 %v787
        %v789 = vpop.xlane.xlu0 %788
        %v790 = vsel %vm768, %v759, -inf
        %791 = vmax.xlane.f32.xlu0 %v790
        %v792 = vpop.xlane.xlu0 %791
        %v793 = vsel %vm768, %v760, -inf
        %794 = vmax.xlane.f32.xlu0 %v793
        %v795 = vpop.xlane.xlu0 %794
        %v796 = vsel %vm768, %v761, -inf
        %797 = vmax.xlane.f32.xlu0 %v796
        %v798 = vpop.xlane.xlu0 %797
        %v799 = vsel %vm768, %v762, -inf
        %800 = vmax.xlane.f32.xlu0 %v799
        %v801 = vpop.xlane.xlu0 %800
        %v802 = vsel %vm768, %v763, -inf
        %803 = vmax.xlane.f32.xlu0 %v802
        %v804 = vpop.xlane.xlu0 %803
        %v805 = vsel %vm768, %v764, -inf
        %806 = vmax.xlane.f32.xlu0 %v805
        %v807 = vpop.xlane.xlu0 %806
        %v808 = vsel %vm768, %v765, -inf
        %809 = vmax.xlane.f32.xlu0 %v808
        %v810 = vpop.xlane.xlu0 %809
        %v811 = vsel %vm768, %v766, -inf
        %812 = vmax.xlane.f32.xlu0 %v811
        %v813 = vpop.xlane.xlu0 %812
        %v814 = vsel %vm768, %v767, -inf
        %815 = vmax.xlane.f32.xlu0 %v814
        %v816 = vpop.xlane.xlu0 %815
        %v817 = vsub.f32 %v752, %v771
        %v818 = vsub.f32 %v753, %v774
        %v819 = vsub.f32 %v754, %v777
        %v820 = vsub.f32 %v755, %v780
        %v821 = vsub.f32 %v756, %v783
        %v822 = vsub.f32 %v757, %v786
        %v823 = vsub.f32 %v758, %v789
        %v824 = vsub.f32 %v759, %v792
        %v825 = vsub.f32 %v760, %v795
        %v826 = vsub.f32 %v761, %v798
        %v827 = vsub.f32 %v762, %v801
        %v828 = vsub.f32 %v763, %v804
        %v829 = vsub.f32 %v764, %v807
        %v830 = vsub.f32 %v765, %v810
        %v831 = vsub.f32 %v766, %v813
        %v832 = vsub.f32 %v767, %v816
        %v833 = vmul.f32 %v817, 1.442695
        %v834 = vpow.pop %v833
        %v835 = vmul.f32 %v818, 1.442695
        %v836 = vpow.pop %v835
        %v837 = vmul.f32 %v819, 1.442695
        %v838 = vpow.pop %v837
        %v839 = vmul.f32 %v820, 1.442695
        %v840 = vpow.pop %v839
        %v841 = vmul.f32 %v821, 1.442695
        %v842 = vpow.pop %v841
        %v843 = vmul.f32 %v822, 1.442695
        %v844 = vpow.pop %v843
        %v845 = vmul.f32 %v823, 1.442695
        %v846 = vpow.pop %v845
        %v847 = vmul.f32 %v824, 1.442695
        %v848 = vpow.pop %v847
        %v849 = vmul.f32 %v825, 1.442695
        %v850 = vpow.pop %v849
        %v851 = vmul.f32 %v826, 1.442695
        %v852 = vpow.pop %v851
        %v853 = vmul.f32 %v827, 1.442695
        %v854 = vpow.pop %v853
        %v855 = vmul.f32 %v828, 1.442695
        %v856 = vpow.pop %v855
        %v857 = vmul.f32 %v829, 1.442695
        %v858 = vpow.pop %v857
        %v859 = vmul.f32 %v830, 1.442695
        %v860 = vpow.pop %v859
        %v861 = vmul.f32 %v831, 1.442695
        %v862 = vpow.pop %v861
        %v863 = vmul.f32 %v832, 1.442695
        %v864 = vpow.pop %v863
        %v865 = vsel %vm768, %v834, 0.0
        %866 = vadd.xlane.f32.xlu0 %v865
        %v867 = vpop.xlane.xlu0 %866
        %v868 = vsel %vm768, %v836, 0.0
        %869 = vadd.xlane.f32.xlu0 %v868
        %v870 = vpop.xlane.xlu0 %869
        %v871 = vsel %vm768, %v838, 0.0
        %872 = vadd.xlane.f32.xlu0 %v871
        %v873 = vpop.xlane.xlu0 %872
        %v874 = vsel %vm768, %v840, 0.0
        %875 = vadd.xlane.f32.xlu0 %v874
        %v876 = vpop.xlane.xlu0 %875
        %v877 = vsel %vm768, %v842, 0.0
        %878 = vadd.xlane.f32.xlu0 %v877
        %v879 = vpop.xlane.xlu0 %878
        %v880 = vsel %vm768, %v844, 0.0
        %881 = vadd.xlane.f32.xlu0 %v880
        %v882 = vpop.xlane.xlu0 %881
        %v883 = vsel %vm768, %v846, 0.0
        %884 = vadd.xlane.f32.xlu0 %v883
        %v885 = vpop.xlane.xlu0 %884
        %v886 = vsel %vm768, %v848, 0.0
        %887 = vadd.xlane.f32.xlu0 %v886
        %v888 = vpop.xlane.xlu0 %887
        %v889 = vsel %vm768, %v850, 0.0
        %890 = vadd.xlane.f32.xlu0 %v889
        %v891 = vpop.xlane.xlu0 %890
        %v892 = vsel %vm768, %v852, 0.0
        %893 = vadd.xlane.f32.xlu0 %v892
        %v894 = vpop.xlane.xlu0 %893
        %v895 = vsel %vm768, %v854, 0.0
        %896 = vadd.xlane.f32.xlu0 %v895
        %v897 = vpop.xlane.xlu0 %896
        %v898 = vsel %vm768, %v856, 0.0
        %899 = vadd.xlane.f32.xlu0 %v898
        %v900 = vpop.xlane.xlu0 %899
        %v901 = vsel %vm768, %v858, 0.0
        %902 = vadd.xlane.f32.xlu0 %v901
        %v903 = vpop.xlane.xlu0 %902
        %v904 = vsel %vm768, %v860, 0.0
        %905 = vadd.xlane.f32.xlu0 %v904
        %v906 = vpop.xlane.xlu0 %905
        %v907 = vsel %vm768, %v862, 0.0
        %908 = vadd.xlane.f32.xlu0 %v907
        %v909 = vpop.xlane.xlu0 %908
        %v910 = vsel %vm768, %v864, 0.0
        %911 = vadd.xlane.f32.xlu0 %v910
        %v912 = vpop.xlane.xlu0 %911
        %v913 = vlog2.pop %v867
        %v914 = vmul.f32 %v913, 0.6931472
        %v915 = vlog2.pop %v870
        %v916 = vmul.f32 %v915, 0.6931472
        %v917 = vlog2.pop %v873
        %v918 = vmul.f32 %v917, 0.6931472
        %v919 = vlog2.pop %v876
        %v920 = vmul.f32 %v919, 0.6931472
        %v921 = vlog2.pop %v879
        %v922 = vmul.f32 %v921, 0.6931472
        %v923 = vlog2.pop %v882
        %v924 = vmul.f32 %v923, 0.6931472
        %v925 = vlog2.pop %v885
        %v926 = vmul.f32 %v925, 0.6931472
        %v927 = vlog2.pop %v888
        %v928 = vmul.f32 %v927, 0.6931472
        %v929 = vlog2.pop %v891
        %v930 = vmul.f32 %v929, 0.6931472
        %v931 = vlog2.pop %v894
        %v932 = vmul.f32 %v931, 0.6931472
        %v933 = vlog2.pop %v897
        %v934 = vmul.f32 %v933, 0.6931472
        %v935 = vlog2.pop %v900
        %v936 = vmul.f32 %v935, 0.6931472
        %v937 = vlog2.pop %v903
        %v938 = vmul.f32 %v937, 0.6931472
        %v939 = vlog2.pop %v906
        %v940 = vmul.f32 %v939, 0.6931472
        %v941 = vlog2.pop %v909
        %v942 = vmul.f32 %v941, 0.6931472
        %v943 = vlog2.pop %v912
        %v944 = vmul.f32 %v943, 0.6931472
        %v945 = vsub.f32 %v817, %v914
        %v946 = vsub.f32 %v818, %v916
        %v947 = vsub.f32 %v819, %v918
        %v948 = vsub.f32 %v820, %v920
        %v949 = vsub.f32 %v821, %v922
        %v950 = vsub.f32 %v822, %v924
        %v951 = vsub.f32 %v823, %v926
        %v952 = vsub.f32 %v824, %v928
        %v953 = vsub.f32 %v825, %v930
        %v954 = vsub.f32 %v826, %v932
        %v955 = vsub.f32 %v827, %v934
        %v956 = vsub.f32 %v828, %v936
        %v957 = vsub.f32 %v829, %v938
        %v958 = vsub.f32 %v830, %v940
        %v959 = vsub.f32 %v831, %v942
        %v960 = vsub.f32 %v832, %v944
        %961 = vxpose.xlu0.b32.start [1/16] %v945, 128
        %962 = vxpose.xlu0.b32.cont [2/16] %v946, 128
        %963 = vxpose.xlu0.b32.cont [3/16] %v947, 128
        %964 = vxpose.xlu0.b32.cont [4/16] %v948, 128
        %965 = vxpose.xlu0.b32.cont [5/16] %v949, 128
        %966 = vxpose.xlu0.b32.cont [6/16] %v950, 128
        %967 = vxpose.xlu0.b32.cont [7/16] %v951, 128
        %968 = vxpose.xlu0.b32.cont [8/16] %v952, 128
        %969 = vxpose.xlu0.b32.cont [9/16] %v953, 128
        %970 = vxpose.xlu0.b32.cont [10/16] %v954, 128
        %971 = vxpose.xlu0.b32.cont [11/16] %v955, 128
        %972 = vxpose.xlu0.b32.cont [12/16] %v956, 128
        %973 = vxpose.xlu0.b32.cont [13/16] %v957, 128
        %974 = vxpose.xlu0.b32.cont [14/16] %v958, 128
        %975 = vxpose.xlu0.b32.cont [15/16] %v959, 128
        %976 = vxpose.xlu0.b32.end [16/16] %v960, 128
        %v977 = vpop.trf.xlu0
        %v978 = vpop.trf.xlu0
        %v979 = vpop.trf.xlu0
        %v980 = vpop.trf.xlu0
        %v981 = vpop.trf.xlu0
        %v982 = vpop.trf.xlu0
        %v983 = vpop.trf.xlu0
        %v984 = vpop.trf.xlu0
        %v985 = vpop.trf.xlu0
        %v986 = vpop.trf.xlu0
        %v987 = vpop.trf.xlu0
        %v988 = vpop.trf.xlu0
        %v989 = vpop.trf.xlu0
        %v990 = vpop.trf.xlu0
        %v991 = vpop.trf.xlu0
        %v992 = vpop.trf.xlu0
        %993 = vst [vmem:[%s137] sm:$0xff] %v977
        %994 = vst [vmem:[%s137 + $0x8] sm:$0xff] %v978
        %s995 = sand.u32 %s71, 1
        %s996 = scalar_lea.sflag [#allocation3], %s995
        %s997 = sand.u32 %s71, 1
        %s998 = smul.addr %s997, 16
        %s999 = scalar_lea.vmem [#allocation2], %s998
        // Predicated region
        $region29: #{tpu_custom_call.1} parent=27 // pred_check
          %p1000 = pneg %p81
        $region30: #{tpu_custom_call.1} parent=27 // pred_check_branch
          %1002 = sbr.rel (%p1000) target = $region32
        $region31: #{tpu_custom_call.1} parent=27 // pred_region
          %s1004 = ssub.s32 256, 256
          %1005 = vsyncadd %s996, %s1004
          %s1006 = smul.addr %s16, 128
          %s1007 = scalar_lea.hbm %s2, %s1006
          %s1008 = sshll.u32 %s999, 4
          %s1009 = int_to_ptr.vmem [resolvable:$true] %s1008
          %1014 = dma.vmem_to_hbm [thread:$0]  %s1009, 256, %s1007, %s996, 128, 256, 8
        $region32: #{tpu_custom_call.1} parent=27 // pred_fallthru
          _
      $region28: #{tpu_custom_call.1} parent=5 // pred_fallthru
        _
      %p1015 = scmp.le.s32.totalorder 2, %s11
      // Predicated region
      $region33: #{tpu_custom_call.1} parent=5 // pred_check
        %p1016 = pneg %p1015
      $region34: #{tpu_custom_call.1} parent=5 // pred_check_branch
        %1018 = sbr.rel (%p1016) target = $region36
      $region35: #{tpu_custom_call.1} parent=5 // pred_region
        %s1019 = ssub.s32 %s11, 2
        // Predicated region
        $region37: #{tpu_custom_call.1} parent=35 // pred_check
          %p1020 = pneg %p87
        $region38: #{tpu_custom_call.1} parent=35 // pred_check_branch
          %1022 = sbr.rel (%p1020) target = $region40
        $region39: #{tpu_custom_call.1} parent=35 // pred_region
          %s1023 = sand.u32 %s72, 1
          %s1024 = scalar_lea.sflag [#allocation3], %s1023
          %s1025 = sand.u32 %s72, 1
          %s1026 = smul.addr %s1025, 16
          %s1027 = scalar_lea.vmem [#allocation2], %s1026
          %1028 = dma.done %s1024, 256
        $region40: #{tpu_custom_call.1} parent=35 // pred_fallthru
          _
      $region36: #{tpu_custom_call.1} parent=5 // pred_fallthru
        _
    $region6: #{tpu_custom_call.1} parent=1 // loop_footer
      %s15 = sadd.s32 1, %s11
    $region7: #{tpu_custom_call.1} parent=1 // loop_footer_branch
      %10 = sbr.rel target = $region3
    $region8: #{tpu_custom_call.1} parent=1 // loop_exit
      _
    %1029 = vsyncpa [#allocation3], 1
    %s1030 = scalar_lea.sflag [#allocation3], 1
    %1031 = vsyncpa %s1030, 1

</llo_original>
